<compile_context>
chip_gen: v7x
topology: tpu7x:2x2x1
jax: 0.10.0
libtpu: 0.0.40
codegen_flags: <defaults>
</compile_context>

<pallas_src>
import jax
import jax.numpy as jnp
from jax.experimental import pallas as pl
from jax.experimental.pallas import tpu as pltpu


def _round_up(x, m):
    return (x + m - 1) // m * m


def _leaky_relu(y):
    return jnp.where(y >= 0.0, y, 0.01 * y)


# --------------------------------------------------------------------------- #
# Kernels
# --------------------------------------------------------------------------- #
def _merge_mix_kernel_f32out(x1_ref, x2_ref, w1_ref, w2_ref, b_ref, o_ref):
    """out_dtype == f32: accumulate straight into the output block (its block
    index is constant over K, so it is VMEM-resident across the reduction).
    Bias + LeakyReLU are applied only on the final K step."""
    k = pl.program_id(2)

    @pl.when(k == 0)
    def _():
        o_ref[...] = jnp.zeros_like(o_ref)

    o_ref[...] += (
        jnp.dot(x1_ref[...], w1_ref[...], preferred_element_type=jnp.float32)
        + jnp.dot(x2_ref[...], w2_ref[...], preferred_element_type=jnp.float32))

    @pl.when(k == pl.num_programs(2) - 1)
    def _():
        o_ref[...] = _leaky_relu(o_ref[...] + b_ref[...])


def _merge_mix_kernel_acc(x1_ref, x2_ref, w1_ref, w2_ref, b_ref, o_ref, acc_ref):
    """Narrow out_dtype path: f32 scratch accumulator, single cast in epilogue."""
    k = pl.program_id(2)

    @pl.when(k == 0)
    def _():
        acc_ref[...] = jnp.zeros_like(acc_ref)

    acc_ref[...] += (
        jnp.dot(x1_ref[...], w1_ref[...], preferred_element_type=jnp.float32)
        + jnp.dot(x2_ref[...], w2_ref[...], preferred_element_type=jnp.float32))

    @pl.when(k == pl.num_programs(2) - 1)
    def _():
        o_ref[...] = _leaky_relu(acc_ref[...] + b_ref[...]).astype(o_ref.dtype)


# --------------------------------------------------------------------------- #
# Sizing helpers
# --------------------------------------------------------------------------- #
def _vmem_limit_bytes():
    """~75% of physical VMEM (Mosaic needs internal scratch), capped at 96 MiB.
    -> ~48 MiB on v7x (64 MiB VMEM), ~96 MiB on v5e/v6e (128 MiB VMEM)."""
    cap = 64 * 1024 * 1024  # conservative fallback (v7x-sized)
    try:
        cap = int(getattr(pltpu.get_tpu_info(), "vmem_capacity_bytes", cap))
    except Exception:
        pass
    return min(cap * 3 // 4, 96 * 1024 * 1024)


def _vmem_usage(tm, tn, tk, itemsize, wbuf=2):
    acts = 2 * (2 * tm * tk * itemsize)       # x1 + x2, double-buffered
    wgts = 2 * (wbuf * tk * tn * itemsize)    # W1 + W2, `wbuf`-deep buffers
    outs = 2 * (tm * tn * 4) + 2 * (tn * 4)   # f32 output block + fused bias
    return acts + wgts + outs


def _choose_tiles(B, dim1, Np, itemsize, budget):
    # M tile: full batch when small (weight-streaming regime), else 256 rows.
    tm = B if B <= 256 else 256
    # N tile: largest lane-multiple candidate that divides the padded width.
    tn = 128
    for cand in (512, 384, 256, 128):
        if Np % cand == 0:
            tn = cand
            break
    # Keep >=2 "parallel" tiles when possible so both v7x TensorCores get work.
    if B <= tm and Np == tn and tn % 256 == 0:
        tn //= 2
    # K tile: keep the whole reduction resident when it fits -> weights stream
    # from HBM exactly once; else the largest 128-multiple dividing dim1.
    if _vmem_usage(tm, tn, dim1, itemsize) <= budget:
        return tm, tn, dim1
    for q in range(dim1 // 128, 0, -1):
        tk = q * 128
        if dim1 % tk == 0 and _vmem_usage(tm, tn, tk, itemsize) <= budget:
            return tm, tn, tk
    return tm, tn, 128   # last resort: wrapper zero-pads K (rare; huge odd dim1)


# --------------------------------------------------------------------------- #
# Parameter packing (ONCE at init) + forward wrapper
# --------------------------------------------------------------------------- #
def prepare_params(w1, w2, b1, b2, *, compute_dtype=jnp.bfloat16):
    """One-time parameter packing (do at init, NOT per forward call):
      * weights cast to the MXU compute dtype (bf16 default),
      * output dim zero-padded to a lane multiple (128) -> dense stores,
      * biases pre-summed, kept in f32 (added on the f32 accumulator).
    Weights are stored pre-transposed as (dim1, dim3).
    TODO(synk): on v7x an fp8 weight path with a per-tile dequant scale in the
    epilogue would halve weight bandwidth again for inference."""
    dim1, dim3 = w1.shape
    Np = _round_up(dim3, 128)
    pad_n = ((0, 0), (0, Np - dim3))
    return {
        "w1": jnp.pad(w1, pad_n).astype(compute_dtype),
        "w2": jnp.pad(w2, pad_n).astype(compute_dtype),
        "b": jnp.pad((b1 + b2).reshape(1, dim3).astype(jnp.float32), pad_n),
        "dim1": dim1,
        "dim3": dim3,
        "compute_dtype": compute_dtype,
    }


def merge_layer_mix(x1, x2, params, *, out_dtype=jnp.float32):
    """Forward: LeakyReLU(x1 @ W1 + x2 @ W2 + (b1 + b2)).  Weights/bias come
    pre-packed from prepare_params; x1/x2 go to the kernel with no concat/pad."""
    w1p, w2p, bp = params["w1"], params["w2"], params["b"]
    dim1, dim3 = params["dim1"], params["dim3"]
    cdt = params["compute_dtype"]
    B = x1.shape[0]
    Np = w1p.shape[1]
    assert x1.shape == (B, dim1) and x2.shape == (B, dim1)

    x1 = x1.astype(cdt) if x1.dtype != cdt else x1
    x2 = x2.astype(cdt) if x2.dtype != cdt else x2
    in_isz = jnp.dtype(cdt).itemsize
    out_isz = jnp.dtype(out_dtype).itemsize

    vmem_limit = _vmem_limit_bytes()
    tm, tn, tk = _choose_tiles(B, dim1, Np, in_isz, int(vmem_limit * 0.85))

    # Rare fallback: chosen K tile does not divide dim1 (huge non-128-multiple
    # reduction). Zero-pad K; padded rows/cols contribute nothing to the dots.
    # TODO(synk): for that regime, pre-pad the weights in prepare_params too.
    Kp = _round_up(dim1, tk)
    if Kp != dim1:
        kpad = ((0, 0), (0, Kp - dim1))
        x1, x2 = jnp.pad(x1, kpad), jnp.pad(x2, kpad)
        w1p = jnp.pad(w1p, ((0, Kp - dim1), (0, 0)))
        w2p = jnp.pad(w2p, ((0, Kp - dim1), (0, 0)))

    Mg, Ng, Kg = pl.cdiv(B, tm), Np // tn, Kp // tk

    # Deeper weight buffering only in the small-tm weight-streaming regime
    # (tiny compute per step would otherwise expose DMA latency).
    deep_wbuf = (tm <= 32 and Mg * Ng * Kg >= 3
                 and _vmem_usage(tm, tn, tk, in_isz, wbuf=3) <= int(vmem_limit * 0.9))
    w_kwargs = {"pipeline_mode": pl.Buffered(3)} if deep_wbuf else {}

    x_map = lambda i, j, k: (i, k)
    w_map = lambda i, j, k: (k, j)
    b_map = lambda i, j, k: (0, j)
    o_map = lambda i, j, k: (i, j)

    direct_f32 = jnp.dtype(out_dtype) == jnp.dtype(jnp.float32)
    kernel = _merge_mix_kernel_f32out if direct_f32 else _merge_mix_kernel_acc
    scratch = [] if direct_f32 else [pltpu.VMEM((tm, tn), jnp.float32)]

    # Grid-level traffic: weights re-read per M tile, activations per N tile.
    cost = pl.CostEstimate(
        flops=int(2 * B * Np * 2 * Kp),
        transcendentals=0,
        bytes_accessed=int(Ng * (x1.size + x2.size) * in_isz
                           + Mg * (w1p.size + w2p.size) * in_isz
                           + Mg * bp.size * 4
                           + B * Np * out_isz),
    )

    out = pl.pallas_call(
        kernel,
        out_shape=jax.ShapeDtypeStruct((B, Np), out_dtype),
        grid_spec=pltpu.PrefetchScalarGridSpec(
            num_scalar_prefetch=0,
            grid=(Mg, Ng, Kg),
            in_specs=[
                pl.BlockSpec((tm, tk), x_map),              # x1
                pl.BlockSpec((tm, tk), x_map),              # x2
                pl.BlockSpec((tk, tn), w_map, **w_kwargs),  # W1
                pl.BlockSpec((tk, tn), w_map, **w_kwargs),  # W2
                pl.BlockSpec((1, tn), b_map),               # fused f32 bias
            ],
            out_specs=pl.BlockSpec((tm, tn), o_map),
            scratch_shapes=scratch,
        ),
        compiler_params=pltpu.CompilerParams(
            dimension_semantics=("parallel", "parallel", "arbitrary"),
            vmem_limit_bytes=int(vmem_limit),
        ),
        cost_estimate=cost,
    )(x1, x2, w1p, w2p, bp)

    # Drop the init-time lane padding (no-op when dim3 is already a 128 mult).
    return out[:, :dim3]


def init_params(key, dim1, dim3):
    """Mirror the PyTorch module's init: xavier_normal_ weights, default
    torch.nn.Linear uniform biases.  Weights stored pre-transposed (dim1, dim3)."""
    k1, k2, k3, k4 = jax.random.split(key, 4)
    std = (2.0 / (dim1 + dim3)) ** 0.5
    w1 = std * jax.random.normal(k1, (dim1, dim3), dtype=jnp.float32)
    w2 = std * jax.random.normal(k2, (dim1, dim3), dtype=jnp.float32)
    bound = 1.0 / (dim1 ** 0.5)
    b1 = jax.random.uniform(k3, (1, dim3), jnp.float32, -bound, bound)
    b2 = jax.random.uniform(k4, (1, dim3), jnp.float32, -bound, bound)
    return w1, w2, b1, b2


if __name__ == "__main__":
    key = jax.random.PRNGKey(0)
    kx1, kx2, kp = jax.random.split(key, 3)

    # Small shapes (the module's dim2 is unused by forward). dim3 is
    # deliberately NOT a multiple of 128 to exercise the init-time N padding.
    B, dim1, dim3 = 8, 48, 96
    x1 = jax.random.normal(kx1, (B, dim1), dtype=jnp.float32)
    x2 = jax.random.normal(kx2, (B, dim1), dtype=jnp.float32)
    w1, w2, b1, b2 = init_params(kp, dim1, dim3)

    # Plain-JAX reference.
    y = x1 @ w1 + b1 + x2 @ w2 + b2
    ref = jnp.where(y >= 0.0, y, 0.01 * y)

    # 1) f32 compute path: tight correctness check.
    params_f32 = prepare_params(w1, w2, b1, b2, compute_dtype=jnp.float32)
    out_f32 = jax.block_until_ready(merge_layer_mix(x1, x2, params_f32))
    assert out_f32.shape == (B, dim3)
    assert jnp.allclose(out_f32, ref, atol=1e-5, rtol=1e-5)

    # 2) Default bf16 compute path (f32 accumulation): dtype-rounding tolerance.
    params_bf16 = prepare_params(w1, w2, b1, b2)
    out_bf16 = jax.block_until_ready(merge_layer_mix(x1, x2, params_bf16))
    assert out_bf16.shape == (B, dim3)
    assert jnp.allclose(out_bf16, ref, atol=5e-2, rtol=5e-2)

    print("KERNEL_OK")
</pallas_src>

<mosaic_0001>
module attributes {stable_mosaic.version = 11 : i64} {
  func.func @_merge_mix_kernel_f32out(%arg0: i32, %arg1: i32, %arg2: i32, %arg3: memref<8x48xf32, #tpu.memory_space<vmem>>, %arg4: memref<8x48xf32, #tpu.memory_space<vmem>>, %arg5: memref<48x128xf32, #tpu.memory_space<vmem>>, %arg6: memref<48x128xf32, #tpu.memory_space<vmem>>, %arg7: memref<1x128xf32, #tpu.memory_space<vmem>>, %arg8: memref<8x128xf32, #tpu.memory_space<vmem>>) attributes {dimension_semantics = [#tpu.dimension_semantics<parallel>, #tpu.dimension_semantics<parallel>, #tpu.dimension_semantics<arbitrary>], iteration_bounds = array<i64: 1, 1, 1>, scalar_prefetch = 0 : i64, scratch_operands = 0 : i64, tpu.core_type = #tpu.core_type<tc>, window_params = [{transform_indices = @transform_0, window_bounds = array<i64: 8, 48>}, {transform_indices = @transform_1, window_bounds = array<i64: 8, 48>}, {transform_indices = @transform_2, window_bounds = array<i64: 48, 128>}, {transform_indices = @transform_3, window_bounds = array<i64: 48, 128>}, {transform_indices = @transform_4, window_bounds = array<i64: 1, 128>}, {transform_indices = @transform_5, window_bounds = array<i64: 8, 128>}]} {
    %c0_i32 = arith.constant 0 : i32
    %0 = arith.cmpi eq, %arg2, %c0_i32 : i32
    %1 = arith.extui %0 : i1 to i32
    %c0_i32_0 = arith.constant 0 : i32
    %2 = arith.cmpi ne, %1, %c0_i32_0 : i32
    scf.if %2 {
      %cst_15 = arith.constant 0.000000e+00 : f32
      %16 = vector.broadcast %cst_15 : f32 to vector<8x128xf32>
      %c0_16 = arith.constant 0 : index
      %c0_17 = arith.constant 0 : index
      %17 = vector.load %arg8[%c0_16, %c0_17] : memref<8x128xf32, #tpu.memory_space<vmem>>, vector<8x128xf32>
      tpu.vector_store %arg8[%c0_16, %c0_17], %16 {strides = array<i32>} : memref<8x128xf32, #tpu.memory_space<vmem>>, vector<8x128xf32>,
    } else {
    }
    %c0 = arith.constant 0 : index
    %c0_1 = arith.constant 0 : index
    %3 = vector.load %arg8[%c0, %c0_1] : memref<8x128xf32, #tpu.memory_space<vmem>>, vector<8x128xf32>
    %c0_2 = arith.constant 0 : index
    %c0_3 = arith.constant 0 : index
    %4 = vector.load %arg3[%c0_2, %c0_3] : memref<8x48xf32, #tpu.memory_space<vmem>>, vector<8x48xf32>
    %c0_4 = arith.constant 0 : index
    %c0_5 = arith.constant 0 : index
    %5 = vector.load %arg5[%c0_4, %c0_5] : memref<48x128xf32, #tpu.memory_space<vmem>>, vector<48x128xf32>
    %cst = arith.constant dense<0.000000e+00> : vector<8x128xf32>
    %6 = tpu.matmul %4, %5, %cst {dimension_numbers = #tpu.dot_dimension_numbers<[1], [0], [0], [1], [0, 0, 1, 1], [], []>} : vector<8x48xf32>, vector<48x128xf32>, vector<8x128xf32> -> vector<8x128xf32>
    %c0_6 = arith.constant 0 : index
    %c0_7 = arith.constant 0 : index
    %7 = vector.load %arg4[%c0_6, %c0_7] : memref<8x48xf32, #tpu.memory_space<vmem>>, vector<8x48xf32>
    %c0_8 = arith.constant 0 : index
    %c0_9 = arith.constant 0 : index
    %8 = vector.load %arg6[%c0_8, %c0_9] : memref<48x128xf32, #tpu.memory_space<vmem>>, vector<48x128xf32>
    %cst_10 = arith.constant dense<0.000000e+00> : vector<8x128xf32>
    %9 = tpu.matmul %7, %8, %cst_10 {dimension_numbers = #tpu.dot_dimension_numbers<[1], [0], [0], [1], [0, 0, 1, 1], [], []>} : vector<8x48xf32>, vector<48x128xf32>, vector<8x128xf32> -> vector<8x128xf32>
    %10 = arith.addf %6, %9 : vector<8x128xf32>
    %11 = arith.addf %3, %10 : vector<8x128xf32>
    %c0_11 = arith.constant 0 : index
    %c0_12 = arith.constant 0 : index
    %12 = vector.load %arg8[%c0_11, %c0_12] : memref<8x128xf32, #tpu.memory_space<vmem>>, vector<8x128xf32>
    tpu.vector_store %arg8[%c0_11, %c0_12], %11 {strides = array<i32>} : memref<8x128xf32, #tpu.memory_space<vmem>>, vector<8x128xf32>,
    %c0_i32_13 = arith.constant 0 : i32
    %13 = arith.cmpi eq, %arg2, %c0_i32_13 : i32
    %14 = arith.extui %13 : i1 to i32
    %c0_i32_14 = arith.constant 0 : i32
    %15 = arith.cmpi ne, %14, %c0_i32_14 : i32
    scf.if %15 {
      %c0_15 = arith.constant 0 : index
      %c0_16 = arith.constant 0 : index
      %16 = vector.load %arg8[%c0_15, %c0_16] : memref<8x128xf32, #tpu.memory_space<vmem>>, vector<8x128xf32>
      %c0_17 = arith.constant 0 : index
      %c0_18 = arith.constant 0 : index
      %17 = vector.load %arg7[%c0_17, %c0_18] : memref<1x128xf32, #tpu.memory_space<vmem>>, vector<1x128xf32>
      %18 = vector.broadcast %17 : vector<1x128xf32> to vector<8x128xf32>
      %19 = arith.addf %16, %18 : vector<8x128xf32>
      %cst_19 = arith.constant 0.000000e+00 : f32
      %20 = vector.broadcast %cst_19 : f32 to vector<8x128xf32>
      %21 = arith.cmpf oge, %19, %20 : vector<8x128xf32>
      %cst_20 = arith.constant 0.00999999977 : f32
      %22 = vector.broadcast %cst_20 : f32 to vector<8x128xf32>
      %23 = arith.mulf %22, %19 : vector<8x128xf32>
      %24 = arith.select %21, %19, %23 : vector<8x128xi1>, vector<8x128xf32>
      %c0_21 = arith.constant 0 : index
      %c0_22 = arith.constant 0 : index
      %25 = vector.load %arg8[%c0_21, %c0_22] : memref<8x128xf32, #tpu.memory_space<vmem>>, vector<8x128xf32>
      tpu.vector_store %arg8[%c0_21, %c0_22], %24 {strides = array<i32>} : memref<8x128xf32, #tpu.memory_space<vmem>>, vector<8x128xf32>,
    } else {
    }
    return
  }
  func.func @transform_0(%arg0: i32, %arg1: i32, %arg2: i32) -> (i32, i32) {
    %c0_i32 = arith.constant 0 : i32
    return %arg0, %arg2 : i32, i32
  }
  func.func @transform_1(%arg0: i32, %arg1: i32, %arg2: i32) -> (i32, i32) {
    %c0_i32 = arith.constant 0 : i32
    return %arg0, %arg2 : i32, i32
  }
  func.func @transform_2(%arg0: i32, %arg1: i32, %arg2: i32) -> (i32, i32) {
    %c0_i32 = arith.constant 0 : i32
    return %arg2, %arg1 : i32, i32
  }
  func.func @transform_3(%arg0: i32, %arg1: i32, %arg2: i32) -> (i32, i32) {
    %c0_i32 = arith.constant 0 : i32
    return %arg2, %arg1 : i32, i32
  }
  func.func @transform_4(%arg0: i32, %arg1: i32, %arg2: i32) -> (i32, i32) {
    %c0_i32 = arith.constant 0 : i32
    %c0_i32_0 = arith.constant 0 : i32
    return %c0_i32, %arg1 : i32, i32
  }
  func.func @transform_5(%arg0: i32, %arg1: i32, %arg2: i32) -> (i32, i32) {
    %c0_i32 = arith.constant 0 : i32
    return %arg0, %arg1 : i32, i32
  }
}

</mosaic_0001>

<llo_original>
// kernel: tpu_custom_call.1
$region0: #{tpu_custom_call.1}
  #allocation0 [shape = 'u32[]', space=smem, size = 0x4, offset = 0x4, fixed_abs, tag = 'smem constant byte address 0x4 - core index']
  #allocation1 [shape = 'u32[144,128]{1,0:T(1,128)}', space=vmem, size = 0x12000, scoped, tag = 'internal scratch']
  %s0 = inlined_call_operand.hbm [shape: f32[8,48], index: 0, kind: input, shape index: {}]
  %s1 = inlined_call_operand.hbm [shape: f32[8,48], index: 1, kind: input, shape index: {}]
  %s2 = inlined_call_operand.hbm [shape: f32[48,128], index: 2, kind: input, shape index: {}]
  %s3 = inlined_call_operand.hbm [shape: f32[48,128], index: 3, kind: input, shape index: {}]
  %s4 = inlined_call_operand.vmem [shape: f32[1,128], index: 4, kind: input, shape index: {}]
  %s5 = inlined_call_operand.hbm [shape: f32[8,128], index: 5, kind: output, shape index: {}]
  %s6 = sld [smem:[#allocation0]]
  $region54: #{tpu_custom_call.1} parent=0
    _
  %s8 = ssub.s32 1, %s6
  %s9 = scalar_select 0, %s8, %s6
  $region1: #{tpu_custom_call.1} parent=0
    #allocation2 [shape = 'u8[4096]{0}', space=vmem, size = 0x1000, scoped, tag = 'input window, operand 0, single buffered']
    #allocation3 [shape = 's32[1]{0}', space=sflag, size = 0x4, scoped, tag = 'scoped memory for tpu_custom_call.1']
    #allocation4 [shape = 's32[1]{0}', space=sflag, size = 0x4, scoped, tag = 'scoped memory for tpu_custom_call.1']
    #allocation5 [shape = 'u8[4096]{0}', space=vmem, size = 0x1000, scoped, tag = 'input window, operand 1, single buffered']
    #allocation6 [shape = 's32[1]{0}', space=sflag, size = 0x4, scoped, tag = 'scoped memory for tpu_custom_call.1']
    #allocation7 [shape = 'u8[24576]{0}', space=vmem, size = 0x6000, scoped, tag = 'input window, operand 2, single buffered']
    #allocation8 [shape = 'u8[24576]{0}', space=vmem, size = 0x6000, scoped, tag = 'input window, operand 3, single buffered']
    #allocation9 [shape = 's32[1]{0}', space=sflag, size = 0x4, scoped, tag = 'scoped memory for tpu_custom_call.1']
    #allocation10 [shape = 'u8[4096]{0}', space=vmem, size = 0x1000, scoped, tag = 'output window, operand 0, single buffered']
    %10 = vsyncpa [#allocation3], 0
    %11 = vsyncpa [#allocation6], 0
    %12 = vsyncpa [#allocation9], 0
    %13 = vsyncpa [#allocation4], 0
    // Predicated region
    $region2: #{tpu_custom_call.1} parent=1 // pred_check
      _
    $region3: #{tpu_custom_call.1} parent=1 // pred_check_branch
      %15 = sbr.rel (0) target = $region5
    $region4: #{tpu_custom_call.1} parent=1 // pred_region
      %s17 = ssub.s32 128, 128
      %18 = vsyncadd [#allocation3], %s17
      %s20 = sshll.u32 [#allocation2], 4
      %s21 = int_to_ptr.vmem [resolvable:$true] %s20
      %23 = dma.hbm_to_vmem [thread:$0]  %s0, 128, %s21, [#allocation3]
    $region5: #{tpu_custom_call.1} parent=1 // pred_fallthru
      _
    // Predicated region
    $region6: #{tpu_custom_call.1} parent=1 // pred_check
      _
    $region7: #{tpu_custom_call.1} parent=1 // pred_check_branch
      %25 = sbr.rel (0) target = $region9
    $region8: #{tpu_custom_call.1} parent=1 // pred_region
      %s27 = ssub.s32 128, 128
      %28 = vsyncadd [#allocation6], %s27
      %s30 = sshll.u32 [#allocation5], 4
      %s31 = int_to_ptr.vmem [resolvable:$true] %s30
      %33 = dma.hbm_to_vmem [thread:$0]  %s1, 128, %s31, [#allocation6]
    $region9: #{tpu_custom_call.1} parent=1 // pred_fallthru
      _
    // Predicated region
    $region10: #{tpu_custom_call.1} parent=1 // pred_check
      _
    $region11: #{tpu_custom_call.1} parent=1 // pred_check_branch
      %35 = sbr.rel (0) target = $region13
    $region12: #{tpu_custom_call.1} parent=1 // pred_region
      %s37 = ssub.s32 768, 768
      %38 = vsyncadd [#allocation6], %s37
      %s39 = sshll.u32 [#allocation7], 4
      %s40 = int_to_ptr.vmem [resolvable:$true] %s39
      %45 = dma.hbm_to_vmem [thread:$0]  %s2, 768, %s40, [#allocation6], 128, 128, 8
    $region13: #{tpu_custom_call.1} parent=1 // pred_fallthru
      _
    // Predicated region
    $region14: #{tpu_custom_call.1} parent=1 // pred_check
      _
    $region15: #{tpu_custom_call.1} parent=1 // pred_check_branch
      %47 = sbr.rel (0) target = $region17
    $region16: #{tpu_custom_call.1} parent=1 // pred_region
      %s49 = ssub.s32 768, 768
      %50 = vsyncadd [#allocation9], %s49
      %s51 = sshll.u32 [#allocation8], 4
      %s52 = int_to_ptr.vmem [resolvable:$true] %s51
      %57 = dma.hbm_to_vmem [thread:$0]  %s3, 768, %s52, [#allocation9], 128, 128, 8
    $region17: #{tpu_custom_call.1} parent=1 // pred_fallthru
      _
    // Predicated region
    $region18: #{tpu_custom_call.1} parent=1 // pred_check
      _
    $region19: #{tpu_custom_call.1} parent=1 // pred_check_branch
      %59 = sbr.rel (0) target = $region21
    $region20: #{tpu_custom_call.1} parent=1 // pred_region
      _
    $region21: #{tpu_custom_call.1} parent=1 // pred_fallthru
      _
    // Predicated region
    $region22: #{tpu_custom_call.1} parent=1 // pred_check
      _
    $region23: #{tpu_custom_call.1} parent=1 // pred_check_branch
      %61 = sbr.rel (0) target = $region25
    $region24: #{tpu_custom_call.1} parent=1 // pred_region
      %62 = dma.done [#allocation3], 128
    $region25: #{tpu_custom_call.1} parent=1 // pred_fallthru
      _
    // Predicated region
    $region26: #{tpu_custom_call.1} parent=1 // pred_check
      _
    $region27: #{tpu_custom_call.1} parent=1 // pred_check_branch
      %64 = sbr.rel (0) target = $region29
    $region28: #{tpu_custom_call.1} parent=1 // pred_region
      %65 = dma.done [#allocation6], 128
    $region29: #{tpu_custom_call.1} parent=1 // pred_fallthru
      _
    // Predicated region
    $region30: #{tpu_custom_call.1} parent=1 // pred_check
      _
    $region31: #{tpu_custom_call.1} parent=1 // pred_check_branch
      %67 = sbr.rel (0) target = $region33
    $region32: #{tpu_custom_call.1} parent=1 // pred_region
      %68 = dma.done [#allocation6], 768
    $region33: #{tpu_custom_call.1} parent=1 // pred_fallthru
      _
    // Predicated region
    $region34: #{tpu_custom_call.1} parent=1 // pred_check
      _
    $region35: #{tpu_custom_call.1} parent=1 // pred_check_branch
      %70 = sbr.rel (0) target = $region37
    $region36: #{tpu_custom_call.1} parent=1 // pred_region
      %71 = dma.done [#allocation9], 768
    $region37: #{tpu_custom_call.1} parent=1 // pred_fallthru
      _
    %p72 = scmp.eq.s32.totalorder 0, 0
    // Predicated region
    $region38: #{tpu_custom_call.1} parent=1 // pred_check
      %p73 = pneg %p72
    $region39: #{tpu_custom_call.1} parent=1 // pred_check_branch
      %75 = sbr.rel (%p73) target = $region41
    $region40: #{tpu_custom_call.1} parent=1 // pred_region
      %76 = vst [vmem:[#allocation10] sm:$0xff] 0.0
    $region41: #{tpu_custom_call.1} parent=1 // pred_fallthru
      _
    %v77 = vld [vmem:[#allocation10] sm:$0xff]
    %v78 = vld [vmem:[#allocation2] sm:$0xff]
    %v79 = vld [vmem:[#allocation7] sm:$0xff]
    %v80 = vld [vmem:[#allocation7 + $0x8] sm:$0xff]
    %v81 = vld [vmem:[#allocation7 + $0x10] sm:$0xff]
    %v82 = vld [vmem:[#allocation7 + $0x18] sm:$0xff]
    %v83 = vld [vmem:[#allocation7 + $0x20] sm:$0xff]
    %v84 = vld [vmem:[#allocation7 + $0x28] sm:$0xff]
    %v85 = vld [vmem:[#allocation5] sm:$0xff]
    %v86 = vld [vmem:[#allocation8] sm:$0xff]
    %v87 = vld [vmem:[#allocation8 + $0x8] sm:$0xff]
    %v88 = vld [vmem:[#allocation8 + $0x10] sm:$0xff]
    %v89 = vld [vmem:[#allocation8 + $0x18] sm:$0xff]
    %v90 = vld [vmem:[#allocation8 + $0x20] sm:$0xff]
    %v91 = vld [vmem:[#allocation8 + $0x28] sm:$0xff]
    %vm92 = vcmask 392192
    %v94 = vsel %vm92, %v85, 0
    %96 = vmatprep.subr.mxu0 0.0
    %97 = vmatpush1.msra.mxu0 %v86
    %98 = vmatprep.subr.mxu0 0.0
    %99 = vmatpush1.msra.mxu0 %v87
    %100 = vmatprep.subr.mxu0 0.0
    %101 = vmatpush1.msra.mxu0 %v88
    %102 = vmatprep.subr.mxu0 0.0
    %103 = vmatpush1.msra.mxu0 %v89
    %104 = vmatprep.subr.mxu0 0.0
    %105 = vmatpush1.msra.mxu0 %v90
    %106 = vmatprep.subr.mxu0 0.0
    %107 = vmatpush1.msra.mxu0 %v91
    %108 = vmatprep.subr.mxu0 0.0
    %109 = vmatpush1.msra.mxu0 0.0
    %110 = vmatprep.subr.mxu0 0.0
    %111 = vmatpush1.msra.mxu0 0.0
    %112 = vmatprep.subr.mxu0 0.0
    %113 = vmatpush1.msra.mxu0 0.0
    %114 = vmatprep.subr.mxu0 0.0
    %115 = vmatpush1.msra.mxu0 0.0
    %116 = vmatprep.subr.mxu0 0.0
    %117 = vmatpush1.msra.mxu0 0.0
    %118 = vmatprep.subr.mxu0 0.0
    %119 = vmatpush1.msra.mxu0 0.0
    %120 = vmatprep.subr.mxu0 0.0
    %121 = vmatpush1.msra.mxu0 0.0
    %122 = vmatprep.subr.mxu0 0.0
    %123 = vmatpush1.msra.mxu0 0.0
    %124 = vmatprep.subr.mxu0 0.0
    %125 = vmatpush1.msra.mxu0 0.0
    %126 = vmatprep.subr.mxu0 0.0
    %127 = vmatpush1.msra.mxu0 0.0
    %128 = vmatprep.subr.mxu0 0.0
    %129 = vmatpush1.msra.mxu0 0.0
    %130 = vmatprep.subr.mxu0 0.0
    %131 = vmatpush1.msra.mxu0 0.0
    %132 = vmatprep.subr.mxu0 0.0
    %133 = vmatpush1.msra.mxu0 0.0
    %134 = vmatprep.subr.mxu0 0.0
    %135 = vmatpush1.msra.mxu0 0.0
    %136 = vmatprep.subr.mxu0 0.0
    %137 = vmatpush1.msra.mxu0 0.0
    %138 = vmatprep.subr.mxu0 0.0
    %139 = vmatpush1.msra.mxu0 0.0
    %140 = vmatprep.subr.mxu0 0.0
    %141 = vmatpush1.msra.mxu0 0.0
    %142 = vmatprep.subr.mxu0 0.0
    %143 = vmatpush1.msra.mxu0 0.0
    %144 = vmatprep.subr.mxu0 0.0
    %145 = vmatpush1.msra.mxu0 0.0
    %146 = vmatprep.subr.mxu0 0.0
    %147 = vmatpush1.msra.mxu0 0.0
    %148 = vmatprep.subr.mxu0 0.0
    %149 = vmatpush1.msra.mxu0 0.0
    %150 = vmatprep.subr.mxu0 0.0
    %151 = vmatpush1.msra.mxu0 0.0
    %152 = vmatprep.subr.mxu0 0.0
    %153 = vmatpush1.msra.mxu0 0.0
    %154 = vmatprep.subr.mxu0 0.0
    %155 = vmatpush1.msra.mxu0 0.0
    %156 = vmatprep.subr.mxu0 0.0
    %157 = vmatpush1.msra.mxu0 0.0
    %158 = vmatprep.subr.mxu0 0.0
    %159 = vmatpush1.msra.mxu0 0.0
    %160 = vmatprep.mubr.f32.mxu0 0.0
    %161 = vmatmul.mubr.f32.gmra.mrb[0].mxu0 %v94
    %v162 = vpop.f32.mrb[0].mxu0
    %v163 = vadd.f32 0.0, %v162
    %v164 = vpop.f32.mrb[0].mxu0
    %165 = vdwg.mxu0
    %v167 = vsel %vm92, %v78, 0
    %169 = vmatprep.subr.mxu0 0.0
    %170 = vmatpush1.msra.mxu0 %v79
    %171 = vmatprep.subr.mxu0 0.0
    %172 = vmatpush1.msra.mxu0 %v80
    %173 = vmatprep.subr.mxu0 0.0
    %174 = vmatpush1.msra.mxu0 %v81
    %175 = vmatprep.subr.mxu0 0.0
    %176 = vmatpush1.msra.mxu0 %v82
    %177 = vmatprep.subr.mxu0 0.0
    %178 = vmatpush1.msra.mxu0 %v83
    %179 = vmatprep.subr.mxu0 0.0
    %180 = vmatpush1.msra.mxu0 %v84
    %181 = vmatprep.subr.mxu0 0.0
    %182 = vmatpush1.msra.mxu0 0.0
    %183 = vmatprep.subr.mxu0 0.0
    %184 = vmatpush1.msra.mxu0 0.0
    %185 = vmatprep.subr.mxu0 0.0
    %186 = vmatpush1.msra.mxu0 0.0
    %187 = vmatprep.subr.mxu0 0.0
    %188 = vmatpush1.msra.mxu0 0.0
    %189 = vmatprep.subr.mxu0 0.0
    %190 = vmatpush1.msra.mxu0 0.0
    %191 = vmatprep.subr.mxu0 0.0
    %192 = vmatpush1.msra.mxu0 0.0
    %193 = vmatprep.subr.mxu0 0.0
    %194 = vmatpush1.msra.mxu0 0.0
    %195 = vmatprep.subr.mxu0 0.0
    %196 = vmatpush1.msra.mxu0 0.0
    %197 = vmatprep.subr.mxu0 0.0
    %198 = vmatpush1.msra.mxu0 0.0
    %199 = vmatprep.subr.mxu0 0.0
    %200 = vmatpush1.msra.mxu0 0.0
    %201 = vmatprep.subr.mxu0 0.0
    %202 = vmatpush1.msra.mxu0 0.0
    %203 = vmatprep.subr.mxu0 0.0
    %204 = vmatpush1.msra.mxu0 0.0
    %205 = vmatprep.subr.mxu0 0.0
    %206 = vmatpush1.msra.mxu0 0.0
    %207 = vmatprep.subr.mxu0 0.0
    %208 = vmatpush1.msra.mxu0 0.0
    %209 = vmatprep.subr.mxu0 0.0
    %210 = vmatpush1.msra.mxu0 0.0
    %211 = vmatprep.subr.mxu0 0.0
    %212 = vmatpush1.msra.mxu0 0.0
    %213 = vmatprep.subr.mxu0 0.0
    %214 = vmatpush1.msra.mxu0 0.0
    %215 = vmatprep.subr.mxu0 0.0
    %216 = vmatpush1.msra.mxu0 0.0
    %217 = vmatprep.subr.mxu0 0.0
    %218 = vmatpush1.msra.mxu0 0.0
    %219 = vmatprep.subr.mxu0 0.0
    %220 = vmatpush1.msra.mxu0 0.0
    %221 = vmatprep.subr.mxu0 0.0
    %222 = vmatpush1.msra.mxu0 0.0
    %223 = vmatprep.subr.mxu0 0.0
    %224 = vmatpush1.msra.mxu0 0.0
    %225 = vmatprep.subr.mxu0 0.0
    %226 = vmatpush1.msra.mxu0 0.0
    %227 = vmatprep.subr.mxu0 0.0
    %228 = vmatpush1.msra.mxu0 0.0
    %229 = vmatprep.subr.mxu0 0.0
    %230 = vmatpush1.msra.mxu0 0.0
    %231 = vmatprep.subr.mxu0 0.0
    %232 = vmatpush1.msra.mxu0 0.0
    %233 = vmatprep.mubr.f32.mxu0 0.0
    %234 = vmatmul.mubr.f32.gmra.mrb[0].mxu0 %v167
    %v235 = vpop.f32.mrb[0].mxu0
    %v236 = vadd.f32 %v163, %v235
    %v237 = vpop.f32.mrb[0].mxu0
    %238 = vdwg.mxu0
    %v239 = vadd.f32 %v77, %v236
    %240 = vst [vmem:[#allocation10] sm:$0xff] %v239
    // Predicated region
    $region42: #{tpu_custom_call.1} parent=1 // pred_check
      %p241 = pneg %p72
    $region43: #{tpu_custom_call.1} parent=1 // pred_check_branch
      %243 = sbr.rel (%p241) target = $region45
    $region44: #{tpu_custom_call.1} parent=1 // pred_region
      %v244 = vld [vmem:[#allocation10] sm:$0xff]
      %v245 = vld [vmem:[%s4] sm:$0x1]
      %v247 = vlaneseq
      %v248 = vshrl.u32 %v247, 7
      %v249 = vsub.s32 0, %v248
      %v250 = vrot.slane %v245, %v249
      %v252 = vadd.f32 %v244, %v250
      %vm253 = vcmp.ge.f32.partialorder %v252, 0.0
      %v254 = vmul.f32 %v252, 0.01
      %v255 = vsel %vm253, %v252, %v254
      %256 = vst [vmem:[#allocation10] sm:$0xff] %v255
    $region45: #{tpu_custom_call.1} parent=1 // pred_fallthru
      _
    // Predicated region
    $region46: #{tpu_custom_call.1} parent=1 // pred_check
      _
    $region47: #{tpu_custom_call.1} parent=1 // pred_check_branch
      %258 = sbr.rel (0) target = $region49
    $region48: #{tpu_custom_call.1} parent=1 // pred_region
      %s260 = ssub.s32 128, 128
      %261 = vsyncadd [#allocation4], %s260
      %s263 = sshll.u32 [#allocation10], 4
      %s264 = int_to_ptr.vmem [resolvable:$true] %s263
      %266 = dma.vmem_to_hbm [thread:$0]  %s264, 128, %s5, [#allocation4]
    $region49: #{tpu_custom_call.1} parent=1 // pred_fallthru
      _
    // Predicated region
    $region50: #{tpu_custom_call.1} parent=1 // pred_check
      _
    $region51: #{tpu_custom_call.1} parent=1 // pred_check_branch
      %268 = sbr.rel (0) target = $region53
    $region52: #{tpu_custom_call.1} parent=1 // pred_region
      %269 = dma.done [#allocation4], 128
    $region53: #{tpu_custom_call.1} parent=1 // pred_fallthru
      _
    %270 = vsyncpa [#allocation3], 1
    %271 = vsyncpa [#allocation6], 1
    %272 = vsyncpa [#allocation9], 1
    %273 = vsyncpa [#allocation4], 1

</llo_original>
